<compile_context>
chip_gen: v6e
topology: v6e:2x2x1
jax: 0.10.0
libtpu: 0.0.40
codegen_flags: <defaults>
</compile_context>

<pallas_src>
import jax
import jax.numpy as jnp
from jax.experimental import pallas as pl
from jax.experimental.pallas import tpu as pltpu

LANE = 128
MAX_TILE_ROWS = 2048   # keeps (bm, OUTp) f32 out tile x 2 buffers well under VMEM


def _round_up(n, m):
    return ((n + m - 1) // m) * m


def _cdiv(a, b):
    return (a + b - 1) // b


def _num_tensorcores():
    """Best-effort TensorCore count for the local chip (1 on v5e/v6e, 2 on v4/v5p/v7x)."""
    try:
        info = pltpu.get_tpu_info()
        for attr in ("num_cores", "core_count", "num_tensorcores", "tensorcores_per_chip"):
            n = getattr(info, attr, None)
            if isinstance(n, int) and n > 0:
                return n
    except Exception:
        pass
    try:
        kind = jax.devices()[0].device_kind.lower()
        if any(t in kind for t in ("v5e", "v5 lite", "v5lite", "v6e", "v6 lite", "v6lite", "lite")):
            return 1
        if any(t in kind for t in ("v4", "v5p", "v7")):
            return 2
    except Exception:
        pass
    return 1


def _pick_bm(B, num_tc):
    """Batch-tile rows. Single step when possible; multiples of 16 otherwise."""
    if num_tc >= 2:
        if B < MAX_TILE_ROWS:
            return B                       # splitting can't hide the ~0.35us/step cost
        steps = 2 * _cdiv(B, 2 * MAX_TILE_ROWS)   # even #steps -> both TCs equally busy
    else:
        if B <= MAX_TILE_ROWS:
            return B                       # one grid step: no per-step overhead at all
        steps = _cdiv(B, MAX_TILE_ROWS)
    return _round_up(_cdiv(B, steps), 16)


def nin1d_kernel(x_ref, w1_ref, b1_ref, w2_ref, b2_ref, w3_ref, b3_ref, o_ref):
    cdt = w1_ref.dtype
    x = x_ref[...].astype(cdt)                                          # f32 -> bf16 (free, under DMA)
    h1 = jnp.dot(x, w1_ref[...], preferred_element_type=jnp.float32) + b1_ref[...]
    h1 = jnp.maximum(h1, 0.0).astype(cdt)                               # ReLU, back to bf16
    h2 = jnp.dot(h1, w2_ref[...], preferred_element_type=jnp.float32) + b2_ref[...]
    h2 = jnp.maximum(h2, 0.0).astype(cdt)                               # ReLU, back to bf16
    y = jnp.dot(h2, w3_ref[...], preferred_element_type=jnp.float32) + b3_ref[...]
    o_ref[...] = y.astype(o_ref.dtype)                                  # lane-dense (bm, OUTp)


def prep_params(params, compute_dtype=jnp.bfloat16):
    """One-time weight prep: collapse L=1 convs to dense mats, pad to 128 lanes, cast bf16."""
    # The centre-tap collapse is exact ONLY because the sequence length is 1
    # (the k=3, pad=1 conv sees zero neighbours). Assert the expected shapes.
    assert params["w1"].ndim == 3 and params["w1"].shape[2] == 3, "expected Conv1d(k=3) weight"
    assert params["w2"].shape[2] == 1 and params["w3"].shape[2] == 1, "expected Conv1d(k=1) weights"

    w1c = params["w1"][:, :, 1].T            # (C_in, H)  centre tap of k=3 conv
    w2c = params["w2"][:, :, 0].T            # (H, H)
    w3c = params["w3"][:, :, 0].T            # (H, out)
    C_in, H = w1c.shape
    out_dim = w3c.shape[1]
    Hp = _round_up(H, LANE)
    OUTp = _round_up(out_dim, LANE)

    def pad2(a, rows, cols):
        return jnp.pad(a, ((0, rows - a.shape[0]), (0, cols - a.shape[1])))

    return {
        "w1": pad2(w1c, C_in, Hp).astype(compute_dtype),
        "w2": pad2(w2c, Hp, Hp).astype(compute_dtype),
        "w3": pad2(w3c, Hp, OUTp).astype(compute_dtype),
        "b1": jnp.pad(params["b1"], (0, Hp - H)).astype(jnp.float32)[None, :],
        "b2": jnp.pad(params["b2"], (0, Hp - H)).astype(jnp.float32)[None, :],
        "b3": jnp.pad(params["b3"], (0, OUTp - out_dim)).astype(jnp.float32)[None, :],
        "out_dim": out_dim,
        "hidden_pad": Hp,
        "out_pad": OUTp,
    }


def nin1d_forward(x, prepped, *, bm=None, out_dtype=jnp.float32, pad_output=False):
    """x: (B, C_in) float32.  prepped: output of prep_params (call once per model).

    out_dtype=jnp.bfloat16 halves the dominant output HBM stream if downstream
    tolerates it.  pad_output=True returns the lane-padded (B, OUTp) slab
    (columns >= out_dim are exactly zero) and avoids the post-kernel column
    slice copy.
    """
    B, C_in = x.shape
    Hp = prepped["hidden_pad"]
    OUTp = prepped["out_pad"]
    out_dim = prepped["out_dim"]

    if bm is None:
        bm = _pick_bm(B, _num_tensorcores())
    bm = min(bm, B)
    if bm < B:
        bm = _round_up(bm, 8)              # (8,128) tiling rule when not full-extent
    grid_b = _cdiv(B, bm)                  # partial last tile: reads unspecified rows,
                                           # writes masked -> no wrapper-side padding

    out_itemsize = jnp.dtype(out_dtype).itemsize
    flops = 2 * B * (C_in * Hp + Hp * Hp + Hp * OUTp)
    bytes_accessed = (
        B * C_in * x.dtype.itemsize                # x read (f32, cast in-kernel)
        + B * OUTp * out_itemsize                  # output write (lane-padded)
        + (C_in * Hp + Hp * Hp + Hp * OUTp) * 2    # weights (bf16)
        + (2 * Hp + OUTp) * 4                      # biases (f32)
    )

    out = pl.pallas_call(
        nin1d_kernel,
        out_shape=jax.ShapeDtypeStruct((B, OUTp), out_dtype),
        grid_spec=pl.GridSpec(
            grid=(grid_b,),
            in_specs=[
                pl.BlockSpec((bm, C_in), lambda i: (i, 0)),     # x tile (batch-tiled)
                pl.BlockSpec((C_in, Hp), lambda i: (0, 0)),     # w1 (grid-invariant)
                pl.BlockSpec((1, Hp), lambda i: (0, 0)),        # b1
                pl.BlockSpec((Hp, Hp), lambda i: (0, 0)),       # w2
                pl.BlockSpec((1, Hp), lambda i: (0, 0)),        # b2
                pl.BlockSpec((Hp, OUTp), lambda i: (0, 0)),     # w3
                pl.BlockSpec((1, OUTp), lambda i: (0, 0)),      # b3
            ],
            out_specs=pl.BlockSpec((bm, OUTp), lambda i: (i, 0)),
        ),
        compiler_params=pltpu.CompilerParams(
            dimension_semantics=("parallel",),
            vmem_limit_bytes=32 * 1024 * 1024,
        ),
        cost_estimate=pl.CostEstimate(
            flops=flops, transcendentals=0, bytes_accessed=bytes_accessed),
    )(x, prepped["w1"], prepped["b1"], prepped["w2"], prepped["b2"],
      prepped["w3"], prepped["b3"])

    if pad_output:
        return out                          # (B, OUTp); columns >= out_dim are zero
    return out[:, :out_dim]


def nin1d_reference(x, params):
    """Pure-JAX f32 reference matching the PyTorch forward exactly (L=1 conv math)."""
    w1c = params["w1"][:, :, 1]
    w2c = params["w2"][:, :, 0]
    w3c = params["w3"][:, :, 0]
    h1 = jnp.maximum(x @ w1c.T + params["b1"], 0.0)
    h2 = jnp.maximum(h1 @ w2c.T + params["b2"], 0.0)
    return h2 @ w3c.T + params["b3"]


def nin1d_reference_bf16(x, prepped):
    """Reference with the same bf16 rounding as the kernel (f32 accumulation)."""
    f32 = lambda a: a.astype(jnp.float32)
    xb = f32(x.astype(jnp.bfloat16))
    h1 = jnp.maximum(xb @ f32(prepped["w1"]) + prepped["b1"], 0.0)
    h1 = f32(h1.astype(jnp.bfloat16))
    h2 = jnp.maximum(h1 @ f32(prepped["w2"]) + prepped["b2"], 0.0)
    h2 = f32(h2.astype(jnp.bfloat16))
    y = h2 @ f32(prepped["w3"]) + prepped["b3"]
    return y[:, :prepped["out_dim"]]


if __name__ == "__main__":
    # Small synthetic config (mirrors args.hidden_dim / args.ex_dim / args.out_dim).
    hidden_dim, ex_dim, out_dim = 32, 8, 16
    C_in = hidden_dim + ex_dim

    key = jax.random.PRNGKey(0)
    kx, kx2, k1, k2, k3, k4, k5, k6 = jax.random.split(key, 8)

    # Deterministic parameter init with PyTorch Conv1d shapes:
    #   w: (out_channels, in_channels, kernel_size), b: (out_channels,)
    params = {
        "w1": 0.1 * jax.random.normal(k1, (hidden_dim, C_in, 3), dtype=jnp.float32),
        "b1": 0.1 * jax.random.normal(k2, (hidden_dim,), dtype=jnp.float32),
        "w2": 0.1 * jax.random.normal(k3, (hidden_dim, hidden_dim, 1), dtype=jnp.float32),
        "b2": 0.1 * jax.random.normal(k4, (hidden_dim,), dtype=jnp.float32),
        "w3": 0.1 * jax.random.normal(k5, (out_dim, hidden_dim, 1), dtype=jnp.float32),
        "b3": 0.1 * jax.random.normal(k6, (out_dim,), dtype=jnp.float32),
    }

    prepped = prep_params(params)          # one-time weight prep (not per forward call)

    # --- Small batch: single grid step, f32 output (module-parity path). ---
    B = 8
    x = jax.random.normal(kx, (B, C_in), dtype=jnp.float32)
    out = jax.block_until_ready(nin1d_forward(x, prepped))
    assert out.shape == (B, out_dim)

    ref_bf16 = nin1d_reference_bf16(x, prepped)
    assert jnp.allclose(out, ref_bf16, atol=1e-4, rtol=1e-4), "mismatch vs bf16 reference"
    ref_f32 = nin1d_reference(x, params)
    assert jnp.allclose(out, ref_f32, atol=5e-2, rtol=1e-1), "mismatch vs f32 reference"

    # --- bf16-output variant (halves the dominant HBM writeback stream). ---
    out_bf16 = jax.block_until_ready(nin1d_forward(x, prepped, out_dtype=jnp.bfloat16))
    assert out_bf16.shape == (B, out_dim)
    assert jnp.allclose(out_bf16.astype(jnp.float32), ref_bf16, atol=1e-2, rtol=1e-2), \
        "mismatch vs bf16 reference (bf16 output)"

    # --- Larger batch that does NOT divide the tile: exercises the multi-step /
    #     masked-partial-tail path (no wrapper-side padding of x). ---
    B2 = 2500
    x2 = jax.random.normal(kx2, (B2, C_in), dtype=jnp.float32)
    out2 = jax.block_until_ready(nin1d_forward(x2, prepped))
    assert out2.shape == (B2, out_dim)
    ref2 = nin1d_reference_bf16(x2, prepped)
    assert jnp.allclose(out2, ref2, atol=1e-3, rtol=1e-3), "mismatch on large/ragged batch"

    print("KERNEL_OK")
</pallas_src>

<mosaic_0001>
module attributes {stable_mosaic.version = 11 : i64} {
  func.func @nin1d_kernel(%arg0: i32, %arg1: memref<8x40xf32, #tpu.memory_space<vmem>>, %arg2: memref<40x128xbf16, #tpu.memory_space<vmem>>, %arg3: memref<1x128xf32, #tpu.memory_space<vmem>>, %arg4: memref<128x128xbf16, #tpu.memory_space<vmem>>, %arg5: memref<1x128xf32, #tpu.memory_space<vmem>>, %arg6: memref<128x128xbf16, #tpu.memory_space<vmem>>, %arg7: memref<1x128xf32, #tpu.memory_space<vmem>>, %arg8: memref<8x128xf32, #tpu.memory_space<vmem>>) attributes {dimension_semantics = [#tpu.dimension_semantics<parallel>], iteration_bounds = array<i64: 1>, scalar_prefetch = 0 : i64, scratch_operands = 0 : i64, tpu.core_type = #tpu.core_type<tc>, window_params = [{transform_indices = @transform_0, window_bounds = array<i64: 8, 40>}, {pipeline_mode = #tpu.pipeline_mode<synchronous>, transform_indices = @transform_1, window_bounds = array<i64: 40, 128>}, {pipeline_mode = #tpu.pipeline_mode<synchronous>, transform_indices = @transform_2, window_bounds = array<i64: 1, 128>}, {pipeline_mode = #tpu.pipeline_mode<synchronous>, transform_indices = @transform_3, window_bounds = array<i64: 128, 128>}, {pipeline_mode = #tpu.pipeline_mode<synchronous>, transform_indices = @transform_4, window_bounds = array<i64: 1, 128>}, {pipeline_mode = #tpu.pipeline_mode<synchronous>, transform_indices = @transform_5, window_bounds = array<i64: 128, 128>}, {pipeline_mode = #tpu.pipeline_mode<synchronous>, transform_indices = @transform_6, window_bounds = array<i64: 1, 128>}, {transform_indices = @transform_7, window_bounds = array<i64: 8, 128>}]} {
    %c0 = arith.constant 0 : index
    %c0_0 = arith.constant 0 : index
    %0 = vector.load %arg1[%c0, %c0_0] : memref<8x40xf32, #tpu.memory_space<vmem>>, vector<8x40xf32>
    %1 = arith.truncf %0 : vector<8x40xf32> to vector<8x40xbf16>
    %c0_1 = arith.constant 0 : index
    %c0_2 = arith.constant 0 : index
    %2 = vector.load %arg2[%c0_1, %c0_2] : memref<40x128xbf16, #tpu.memory_space<vmem>>, vector<40x128xbf16>
    %cst = arith.constant dense<0.000000e+00> : vector<8x128xf32>
    %3 = tpu.matmul %1, %2, %cst {dimension_numbers = #tpu.dot_dimension_numbers<[1], [0], [0], [1], [0, 0, 1, 1], [], []>} : vector<8x40xbf16>, vector<40x128xbf16>, vector<8x128xf32> -> vector<8x128xf32>
    %c0_3 = arith.constant 0 : index
    %c0_4 = arith.constant 0 : index
    %4 = vector.load %arg3[%c0_3, %c0_4] : memref<1x128xf32, #tpu.memory_space<vmem>>, vector<1x128xf32>
    %5 = vector.broadcast %4 : vector<1x128xf32> to vector<8x128xf32>
    %6 = arith.addf %3, %5 : vector<8x128xf32>
    %cst_5 = arith.constant 0.000000e+00 : f32
    %7 = vector.broadcast %cst_5 : f32 to vector<8x128xf32>
    %8 = arith.maximumf %6, %7 : vector<8x128xf32>
    %9 = arith.truncf %8 : vector<8x128xf32> to vector<8x128xbf16>
    %c0_6 = arith.constant 0 : index
    %c0_7 = arith.constant 0 : index
    %10 = vector.load %arg4[%c0_6, %c0_7] : memref<128x128xbf16, #tpu.memory_space<vmem>>, vector<128x128xbf16>
    %cst_8 = arith.constant dense<0.000000e+00> : vector<8x128xf32>
    %11 = tpu.matmul %9, %10, %cst_8 {dimension_numbers = #tpu.dot_dimension_numbers<[1], [0], [0], [1], [0, 0, 1, 1], [], []>} : vector<8x128xbf16>, vector<128x128xbf16>, vector<8x128xf32> -> vector<8x128xf32>
    %c0_9 = arith.constant 0 : index
    %c0_10 = arith.constant 0 : index
    %12 = vector.load %arg5[%c0_9, %c0_10] : memref<1x128xf32, #tpu.memory_space<vmem>>, vector<1x128xf32>
    %13 = vector.broadcast %12 : vector<1x128xf32> to vector<8x128xf32>
    %14 = arith.addf %11, %13 : vector<8x128xf32>
    %cst_11 = arith.constant 0.000000e+00 : f32
    %15 = vector.broadcast %cst_11 : f32 to vector<8x128xf32>
    %16 = arith.maximumf %14, %15 : vector<8x128xf32>
    %17 = arith.truncf %16 : vector<8x128xf32> to vector<8x128xbf16>
    %c0_12 = arith.constant 0 : index
    %c0_13 = arith.constant 0 : index
    %18 = vector.load %arg6[%c0_12, %c0_13] : memref<128x128xbf16, #tpu.memory_space<vmem>>, vector<128x128xbf16>
    %cst_14 = arith.constant dense<0.000000e+00> : vector<8x128xf32>
    %19 = tpu.matmul %17, %18, %cst_14 {dimension_numbers = #tpu.dot_dimension_numbers<[1], [0], [0], [1], [0, 0, 1, 1], [], []>} : vector<8x128xbf16>, vector<128x128xbf16>, vector<8x128xf32> -> vector<8x128xf32>
    %c0_15 = arith.constant 0 : index
    %c0_16 = arith.constant 0 : index
    %20 = vector.load %arg7[%c0_15, %c0_16] : memref<1x128xf32, #tpu.memory_space<vmem>>, vector<1x128xf32>
    %21 = vector.broadcast %20 : vector<1x128xf32> to vector<8x128xf32>
    %22 = arith.addf %19, %21 : vector<8x128xf32>
    %c0_17 = arith.constant 0 : index
    %c0_18 = arith.constant 0 : index
    %23 = vector.load %arg8[%c0_17, %c0_18] : memref<8x128xf32, #tpu.memory_space<vmem>>, vector<8x128xf32>
    tpu.vector_store %arg8[%c0_17, %c0_18], %22 {strides = array<i32>} : memref<8x128xf32, #tpu.memory_space<vmem>>, vector<8x128xf32>,
    return
  }
  func.func @transform_0(%arg0: i32) -> (i32, i32) {
    %c0_i32 = arith.constant 0 : i32
    %c0_i32_0 = arith.constant 0 : i32
    return %arg0, %c0_i32 : i32, i32
  }
  func.func @transform_1(%arg0: i32) -> (i32, i32) {
    %c0_i32 = arith.constant 0 : i32
    %c0_i32_0 = arith.constant 0 : i32
    %c0_i32_1 = arith.constant 0 : i32
    return %c0_i32, %c0_i32_0 : i32, i32
  }
  func.func @transform_2(%arg0: i32) -> (i32, i32) {
    %c0_i32 = arith.constant 0 : i32
    %c0_i32_0 = arith.constant 0 : i32
    %c0_i32_1 = arith.constant 0 : i32
    return %c0_i32, %c0_i32_0 : i32, i32
  }
  func.func @transform_3(%arg0: i32) -> (i32, i32) {
    %c0_i32 = arith.constant 0 : i32
    %c0_i32_0 = arith.constant 0 : i32
    %c0_i32_1 = arith.constant 0 : i32
    return %c0_i32, %c0_i32_0 : i32, i32
  }
  func.func @transform_4(%arg0: i32) -> (i32, i32) {
    %c0_i32 = arith.constant 0 : i32
    %c0_i32_0 = arith.constant 0 : i32
    %c0_i32_1 = arith.constant 0 : i32
    return %c0_i32, %c0_i32_0 : i32, i32
  }
  func.func @transform_5(%arg0: i32) -> (i32, i32) {
    %c0_i32 = arith.constant 0 : i32
    %c0_i32_0 = arith.constant 0 : i32
    %c0_i32_1 = arith.constant 0 : i32
    return %c0_i32, %c0_i32_0 : i32, i32
  }
  func.func @transform_6(%arg0: i32) -> (i32, i32) {
    %c0_i32 = arith.constant 0 : i32
    %c0_i32_0 = arith.constant 0 : i32
    %c0_i32_1 = arith.constant 0 : i32
    return %c0_i32, %c0_i32_0 : i32, i32
  }
  func.func @transform_7(%arg0: i32) -> (i32, i32) {
    %c0_i32 = arith.constant 0 : i32
    %c0_i32_0 = arith.constant 0 : i32
    return %arg0, %c0_i32 : i32, i32
  }
}

</mosaic_0001>

<llo_original>
// kernel: tpu_custom_call.1
$region0: #{tpu_custom_call.1}
  #allocation0 [shape = 'u32[]', space=smem, size = 0x4, offset = 0x4, fixed_abs, tag = 'smem constant byte address 0x4 - core index']
  #allocation1 [shape = 'u32[144,128]{1,0:T(1,128)}', space=vmem, size = 0x12000, scoped, tag = 'internal scratch']
  %s0 = inlined_call_operand.hbm [shape: f32[8,40], index: 0, kind: input, shape index: {}]
  %s1 = inlined_call_operand.hbm [shape: bf16[40,128], index: 1, kind: input, shape index: {}]
  %s2 = inlined_call_operand.vmem [shape: f32[1,128], index: 2, kind: input, shape index: {}]
  %s3 = inlined_call_operand.hbm [shape: bf16[128,128], index: 3, kind: input, shape index: {}]
  %s4 = inlined_call_operand.vmem [shape: f32[1,128], index: 4, kind: input, shape index: {}]
  %s5 = inlined_call_operand.hbm [shape: bf16[128,128], index: 5, kind: input, shape index: {}]
  %s6 = inlined_call_operand.vmem [shape: f32[1,128], index: 6, kind: input, shape index: {}]
  %s7 = inlined_call_operand.hbm [shape: f32[8,128], index: 7, kind: output, shape index: {}]
  %s8 = sld [smem:[#allocation0]]
  $region54: #{tpu_custom_call.1} parent=0
    _
  %s10 = ssub.s32 1, %s8
  %s11 = scalar_select 0, %s10, %s8
  $region1: #{tpu_custom_call.1} parent=0
    #allocation2 [shape = 'u8[4096]{0}', space=vmem, size = 0x1000, scoped, tag = 'input window, operand 0, single buffered']
    #allocation3 [shape = 's32[1]{0}', space=sflag, size = 0x4, scoped, tag = 'scoped memory for tpu_custom_call.1']
    #allocation4 [shape = 's32[1]{0}', space=sflag, size = 0x4, scoped, tag = 'scoped memory for tpu_custom_call.1']
    #allocation5 [shape = 'u8[10240]{0}', space=vmem, size = 0x2800, scoped, tag = 'input window, operand 1, single buffered']
    #allocation6 [shape = 's32[1]{0}', space=sflag, size = 0x4, scoped, tag = 'scoped memory for tpu_custom_call.1']
    #allocation7 [shape = 'u8[32768]{0}', space=vmem, size = 0x8000, scoped, tag = 'input window, operand 3, single buffered']
    #allocation8 [shape = 'u8[32768]{0}', space=vmem, size = 0x8000, scoped, tag = 'input window, operand 5, single buffered']
    #allocation9 [shape = 's32[1]{0}', space=sflag, size = 0x4, scoped, tag = 'scoped memory for tpu_custom_call.1']
    #allocation10 [shape = 'u8[4096]{0}', space=vmem, size = 0x1000, scoped, tag = 'output window, operand 0, single buffered']
    %12 = vsyncpa [#allocation3], 0
    %13 = vsyncpa [#allocation6], 0
    %14 = vsyncpa [#allocation9], 0
    %15 = vsyncpa [#allocation4], 0
    // Predicated region
    $region2: #{tpu_custom_call.1} parent=1 // pred_check
      _
    $region3: #{tpu_custom_call.1} parent=1 // pred_check_branch
      %17 = sbr.rel (0) target = $region5
    $region4: #{tpu_custom_call.1} parent=1 // pred_region
      %s19 = ssub.s32 128, 128
      %20 = vsyncadd [#allocation3], %s19
      %s22 = sshll.u32 [#allocation2], 4
      %s23 = int_to_ptr.vmem [resolvable:$true] %s22
      %25 = dma.hbm_to_vmem [thread:$0]  %s0, 128, %s23, [#allocation3]
    $region5: #{tpu_custom_call.1} parent=1 // pred_fallthru
      _
    // Predicated region
    $region6: #{tpu_custom_call.1} parent=1 // pred_check
      _
    $region7: #{tpu_custom_call.1} parent=1 // pred_check_branch
      %27 = sbr.rel (0) target = $region9
    $region8: #{tpu_custom_call.1} parent=1 // pred_region
      %s29 = ssub.s32 320, 320
      %30 = vsyncadd [#allocation6], %s29
      %s31 = sshll.u32 [#allocation5], 4
      %s32 = int_to_ptr.vmem [resolvable:$true] %s31
      %37 = dma.hbm_to_vmem [thread:$0]  %s1, 320, %s32, [#allocation6], 64, 64, 4
    $region9: #{tpu_custom_call.1} parent=1 // pred_fallthru
      _
    // Predicated region
    $region10: #{tpu_custom_call.1} parent=1 // pred_check
      _
    $region11: #{tpu_custom_call.1} parent=1 // pred_check_branch
      %39 = sbr.rel (0) target = $region13
    $region12: #{tpu_custom_call.1} parent=1 // pred_region
      _
    $region13: #{tpu_custom_call.1} parent=1 // pred_fallthru
      _
    // Predicated region
    $region14: #{tpu_custom_call.1} parent=1 // pred_check
      _
    $region15: #{tpu_custom_call.1} parent=1 // pred_check_branch
      %41 = sbr.rel (0) target = $region17
    $region16: #{tpu_custom_call.1} parent=1 // pred_region
      %s43 = ssub.s32 1024, 1024
      %44 = vsyncadd [#allocation6], %s43
      %s45 = sshll.u32 [#allocation7], 4
      %s46 = int_to_ptr.vmem [resolvable:$true] %s45
      %51 = dma.hbm_to_vmem [thread:$0]  %s3, 1024, %s46, [#allocation6], 64, 64, 4
    $region17: #{tpu_custom_call.1} parent=1 // pred_fallthru
      _
    // Predicated region
    $region18: #{tpu_custom_call.1} parent=1 // pred_check
      _
    $region19: #{tpu_custom_call.1} parent=1 // pred_check_branch
      %53 = sbr.rel (0) target = $region21
    $region20: #{tpu_custom_call.1} parent=1 // pred_region
      _
    $region21: #{tpu_custom_call.1} parent=1 // pred_fallthru
      _
    // Predicated region
    $region22: #{tpu_custom_call.1} parent=1 // pred_check
      _
    $region23: #{tpu_custom_call.1} parent=1 // pred_check_branch
      %55 = sbr.rel (0) target = $region25
    $region24: #{tpu_custom_call.1} parent=1 // pred_region
      %s57 = ssub.s32 1024, 1024
      %58 = vsyncadd [#allocation9], %s57
      %s59 = sshll.u32 [#allocation8], 4
      %s60 = int_to_ptr.vmem [resolvable:$true] %s59
      %65 = dma.hbm_to_vmem [thread:$0]  %s5, 1024, %s60, [#allocation9], 64, 64, 4
    $region25: #{tpu_custom_call.1} parent=1 // pred_fallthru
      _
    // Predicated region
    $region26: #{tpu_custom_call.1} parent=1 // pred_check
      _
    $region27: #{tpu_custom_call.1} parent=1 // pred_check_branch
      %67 = sbr.rel (0) target = $region29
    $region28: #{tpu_custom_call.1} parent=1 // pred_region
      _
    $region29: #{tpu_custom_call.1} parent=1 // pred_fallthru
      _
    // Predicated region
    $region30: #{tpu_custom_call.1} parent=1 // pred_check
      _
    $region31: #{tpu_custom_call.1} parent=1 // pred_check_branch
      %69 = sbr.rel (0) target = $region33
    $region32: #{tpu_custom_call.1} parent=1 // pred_region
      %70 = dma.done [#allocation3], 128
    $region33: #{tpu_custom_call.1} parent=1 // pred_fallthru
      _
    // Predicated region
    $region34: #{tpu_custom_call.1} parent=1 // pred_check
      _
    $region35: #{tpu_custom_call.1} parent=1 // pred_check_branch
      %72 = sbr.rel (0) target = $region37
    $region36: #{tpu_custom_call.1} parent=1 // pred_region
      %73 = dma.done [#allocation6], 320
    $region37: #{tpu_custom_call.1} parent=1 // pred_fallthru
      _
    // Predicated region
    $region38: #{tpu_custom_call.1} parent=1 // pred_check
      _
    $region39: #{tpu_custom_call.1} parent=1 // pred_check_branch
      %75 = sbr.rel (0) target = $region41
    $region40: #{tpu_custom_call.1} parent=1 // pred_region
      %76 = dma.done [#allocation6], 1024
    $region41: #{tpu_custom_call.1} parent=1 // pred_fallthru
      _
    // Predicated region
    $region42: #{tpu_custom_call.1} parent=1 // pred_check
      _
    $region43: #{tpu_custom_call.1} parent=1 // pred_check_branch
      %78 = sbr.rel (0) target = $region45
    $region44: #{tpu_custom_call.1} parent=1 // pred_region
      %79 = dma.done [#allocation9], 1024
    $region45: #{tpu_custom_call.1} parent=1 // pred_fallthru
      _
    %v81 = vld [vmem:[#allocation2] sm:$0xff]
    %v82 = vpack.c.bf16 %v81, %v81
    %v83 = vld [vmem:[#allocation5] sm:$0xf]
    %v84 = vld [vmem:[#allocation5 + $0x4] sm:$0xf]
    %v85 = vld [vmem:[#allocation5 + $0x8] sm:$0xf]
    %v86 = vld [vmem:[#allocation5 + $0xc] sm:$0xf]
    %v87 = vld [vmem:[#allocation5 + $0x10] sm:$0xf]
    %v88 = vld [vmem:[%s2] sm:$0x1]
    %v90 = vlaneseq
    %v91 = vshrl.u32 %v90, 7
    %v92 = vsub.s32 0, %v91
    %v93 = vrot.slane %v88, %v92
    %v100 = vunpack.c.l.b16 %v83
    %v101 = vunpack.c.l.b16 %v84
    %v102 = vunpack.c.l.b16 %v85
    %v103 = vunpack.c.l.b16 %v86
    %v104 = vunpack.c.l.b16 %v87
    %v105 = vpack.c.b16 %v101, %v100
    %v106 = vpack.c.b16 %v103, %v102
    %v107 = vpack.c.b16 %v104, %v104
    %vm110 = vcmask 326656
    %v112 = vsel %vm110, %v82, 0
    %vm114 = vcmask 1043456
    %v116 = vsel %vm114, %v107, 0
    %118 = vmatprep.subr.bf16.mxu0 0
    %119 = vmatpush1.bf16.msra.mxu0 0
    %120 = vmatprep.subr.bf16.mxu0 0
    %121 = vmatpush1.bf16.msra.mxu0 0
    %122 = vmatprep.subr.bf16.mxu0 0
    %123 = vmatpush1.bf16.msra.mxu0 0
    %124 = vmatprep.subr.bf16.mxu0 0
    %125 = vmatpush1.bf16.msra.mxu0 0
    %126 = vmatprep.subr.bf16.mxu0 0
    %127 = vmatpush1.bf16.msra.mxu0 0
    %128 = vmatprep.subr.bf16.mxu0 0
    %129 = vmatpush1.bf16.msra.mxu0 %v116
    %130 = vmatprep.subr.bf16.mxu0 0
    %131 = vmatpush1.bf16.msra.mxu0 %v106
    %132 = vmatprep.subr.bf16.mxu0 0
    %133 = vmatpush1.bf16.msra.mxu0 %v105
    %134 = vmatprep.subr.bf16.mxu0 0
    %135 = vmatpush2.bf16.msra.mxu0 0
    %136 = vmatprep.subr.bf16.mxu0 0
    %137 = vmatpush2.bf16.msra.mxu0 0
    %138 = vmatprep.subr.bf16.mxu0 0
    %139 = vmatpush2.bf16.msra.mxu0 0
    %140 = vmatprep.subr.bf16.mxu0 0
    %141 = vmatpush2.bf16.msra.mxu0 0
    %142 = vmatprep.subr.bf16.mxu0 0
    %143 = vmatpush2.bf16.msra.mxu0 0
    %144 = vmatprep.subr.bf16.mxu0 0
    %145 = vmatpush2.bf16.msra.mxu0 0
    %146 = vmatprep.subr.bf16.mxu0 0
    %147 = vmatpush2.bf16.msra.mxu0 0
    %148 = vmatprep.subr.bf16.mxu0 0
    %149 = vmatpush2.bf16.msra.mxu0 0
    %150 = vmatprep.mubr.bf16.mxu0 0
    %151 = vmatmul.mubr.bf16.gmra.mxu0 %v112
    %v152 = vpop.f32.mrf.mxu0
    %v153 = vadd.f32 %v93, %v152
    %v154 = vpop.f32.mrf.mxu0
    %v155 = vpop.f32.mrf.mxu0
    %v156 = vpop.f32.mrf.mxu0
    %157 = vdwg.mxu0
    %v158 = vmax.f32 %v153, 0.0
    %v159 = vpack.c.bf16 %v158, %v158
    %v160 = vld [vmem:[#allocation7] sm:$0xf]
    %v161 = vld [vmem:[#allocation7 + $0x4] sm:$0xf]
    %v162 = vld [vmem:[#allocation7 + $0x8] sm:$0xf]
    %v163 = vld [vmem:[#allocation7 + $0xc] sm:$0xf]
    %v164 = vld [vmem:[#allocation7 + $0x10] sm:$0xf]
    %v165 = vld [vmem:[#allocation7 + $0x14] sm:$0xf]
    %v166 = vld [vmem:[#allocation7 + $0x18] sm:$0xf]
    %v167 = vld [vmem:[#allocation7 + $0x1c] sm:$0xf]
    %v168 = vld [vmem:[#allocation7 + $0x20] sm:$0xf]
    %v169 = vld [vmem:[#allocation7 + $0x24] sm:$0xf]
    %v170 = vld [vmem:[#allocation7 + $0x28] sm:$0xf]
    %v171 = vld [vmem:[#allocation7 + $0x2c] sm:$0xf]
    %v172 = vld [vmem:[#allocation7 + $0x30] sm:$0xf]
    %v173 = vld [vmem:[#allocation7 + $0x34] sm:$0xf]
    %v174 = vld [vmem:[#allocation7 + $0x38] sm:$0xf]
    %v175 = vld [vmem:[#allocation7 + $0x3c] sm:$0xf]
    %v176 = vld [vmem:[%s4] sm:$0x1]
    %v178 = vlaneseq
    %v179 = vshrl.u32 %v178, 7
    %v180 = vsub.s32 0, %v179
    %v181 = vrot.slane %v176, %v180
    %v199 = vunpack.c.l.b16 %v160
    %v200 = vunpack.c.l.b16 %v161
    %v201 = vunpack.c.l.b16 %v162
    %v202 = vunpack.c.l.b16 %v163
    %v203 = vunpack.c.l.b16 %v164
    %v204 = vunpack.c.l.b16 %v165
    %v205 = vunpack.c.l.b16 %v166
    %v206 = vunpack.c.l.b16 %v167
    %v207 = vunpack.c.l.b16 %v168
    %v208 = vunpack.c.l.b16 %v169
    %v209 = vunpack.c.l.b16 %v170
    %v210 = vunpack.c.l.b16 %v171
    %v211 = vunpack.c.l.b16 %v172
    %v212 = vunpack.c.l.b16 %v173
    %v213 = vunpack.c.l.b16 %v174
    %v214 = vunpack.c.l.b16 %v175
    %v215 = vpack.c.b16 %v200, %v199
    %v216 = vpack.c.b16 %v202, %v201
    %v217 = vpack.c.b16 %v204, %v203
    %v218 = vpack.c.b16 %v206, %v205
    %v219 = vpack.c.b16 %v208, %v207
    %v220 = vpack.c.b16 %v210, %v209
    %v221 = vpack.c.b16 %v212, %v211
    %v222 = vpack.c.b16 %v214, %v213
    %231 = vmatprep.subr.bf16.mxu0 0
    %232 = vmatpush1.bf16.msra.mxu0 %v222
    %233 = vmatprep.subr.bf16.mxu0 0
    %234 = vmatpush1.bf16.msra.mxu0 %v221
    %235 = vmatprep.subr.bf16.mxu0 0
    %236 = vmatpush1.bf16.msra.mxu0 %v220
    %237 = vmatprep.subr.bf16.mxu0 0
    %238 = vmatpush1.bf16.msra.mxu0 %v219
    %239 = vmatprep.subr.bf16.mxu0 0
    %240 = vmatpush1.bf16.msra.mxu0 %v218
    %241 = vmatprep.subr.bf16.mxu0 0
    %242 = vmatpush1.bf16.msra.mxu0 %v217
    %243 = vmatprep.subr.bf16.mxu0 0
    %244 = vmatpush1.bf16.msra.mxu0 %v216
    %245 = vmatprep.subr.bf16.mxu0 0
    %246 = vmatpush1.bf16.msra.mxu0 %v215
    %247 = vmatprep.subr.bf16.mxu0 0
    %248 = vmatpush2.bf16.msra.mxu0 0
    %249 = vmatprep.subr.bf16.mxu0 0
    %250 = vmatpush2.bf16.msra.mxu0 0
    %251 = vmatprep.subr.bf16.mxu0 0
    %252 = vmatpush2.bf16.msra.mxu0 0
    %253 = vmatprep.subr.bf16.mxu0 0
    %254 = vmatpush2.bf16.msra.mxu0 0
    %255 = vmatprep.subr.bf16.mxu0 0
    %256 = vmatpush2.bf16.msra.mxu0 0
    %257 = vmatprep.subr.bf16.mxu0 0
    %258 = vmatpush2.bf16.msra.mxu0 0
    %259 = vmatprep.subr.bf16.mxu0 0
    %260 = vmatpush2.bf16.msra.mxu0 0
    %261 = vmatprep.subr.bf16.mxu0 0
    %262 = vmatpush2.bf16.msra.mxu0 0
    %263 = vmatprep.mubr.bf16.mxu0 0
    %264 = vmatmul.mubr.bf16.gmra.mxu0 %v159
    %v265 = vpop.f32.mrf.mxu0
    %v266 = vadd.f32 %v181, %v265
    %v267 = vpop.f32.mrf.mxu0
    %v268 = vpop.f32.mrf.mxu0
    %v269 = vpop.f32.mrf.mxu0
    %270 = vdwg.mxu0
    %v271 = vmax.f32 %v266, 0.0
    %v272 = vpack.c.bf16 %v271, %v271
    %v273 = vld [vmem:[#allocation8] sm:$0xf]
    %v274 = vld [vmem:[#allocation8 + $0x4] sm:$0xf]
    %v275 = vld [vmem:[#allocation8 + $0x8] sm:$0xf]
    %v276 = vld [vmem:[#allocation8 + $0xc] sm:$0xf]
    %v277 = vld [vmem:[#allocation8 + $0x10] sm:$0xf]
    %v278 = vld [vmem:[#allocation8 + $0x14] sm:$0xf]
    %v279 = vld [vmem:[#allocation8 + $0x18] sm:$0xf]
    %v280 = vld [vmem:[#allocation8 + $0x1c] sm:$0xf]
    %v281 = vld [vmem:[#allocation8 + $0x20] sm:$0xf]
    %v282 = vld [vmem:[#allocation8 + $0x24] sm:$0xf]
    %v283 = vld [vmem:[#allocation8 + $0x28] sm:$0xf]
    %v284 = vld [vmem:[#allocation8 + $0x2c] sm:$0xf]
    %v285 = vld [vmem:[#allocation8 + $0x30] sm:$0xf]
    %v286 = vld [vmem:[#allocation8 + $0x34] sm:$0xf]
    %v287 = vld [vmem:[#allocation8 + $0x38] sm:$0xf]
    %v288 = vld [vmem:[#allocation8 + $0x3c] sm:$0xf]
    %v289 = vld [vmem:[%s6] sm:$0x1]
    %v291 = vlaneseq
    %v292 = vshrl.u32 %v291, 7
    %v293 = vsub.s32 0, %v292
    %v294 = vrot.slane %v289, %v293
    %v312 = vunpack.c.l.b16 %v273
    %v313 = vunpack.c.l.b16 %v274
    %v314 = vunpack.c.l.b16 %v275
    %v315 = vunpack.c.l.b16 %v276
    %v316 = vunpack.c.l.b16 %v277
    %v317 = vunpack.c.l.b16 %v278
    %v318 = vunpack.c.l.b16 %v279
    %v319 = vunpack.c.l.b16 %v280
    %v320 = vunpack.c.l.b16 %v281
    %v321 = vunpack.c.l.b16 %v282
    %v322 = vunpack.c.l.b16 %v283
    %v323 = vunpack.c.l.b16 %v284
    %v324 = vunpack.c.l.b16 %v285
    %v325 = vunpack.c.l.b16 %v286
    %v326 = vunpack.c.l.b16 %v287
    %v327 = vunpack.c.l.b16 %v288
    %v328 = vpack.c.b16 %v313, %v312
    %v329 = vpack.c.b16 %v315, %v314
    %v330 = vpack.c.b16 %v317, %v316
    %v331 = vpack.c.b16 %v319, %v318
    %v332 = vpack.c.b16 %v321, %v320
    %v333 = vpack.c.b16 %v323, %v322
    %v334 = vpack.c.b16 %v325, %v324
    %v335 = vpack.c.b16 %v327, %v326
    %344 = vmatprep.subr.bf16.mxu0 0
    %345 = vmatpush1.bf16.msra.mxu0 %v335
    %346 = vmatprep.subr.bf16.mxu0 0
    %347 = vmatpush1.bf16.msra.mxu0 %v334
    %348 = vmatprep.subr.bf16.mxu0 0
    %349 = vmatpush1.bf16.msra.mxu0 %v333
    %350 = vmatprep.subr.bf16.mxu0 0
    %351 = vmatpush1.bf16.msra.mxu0 %v332
    %352 = vmatprep.subr.bf16.mxu0 0
    %353 = vmatpush1.bf16.msra.mxu0 %v331
    %354 = vmatprep.subr.bf16.mxu0 0
    %355 = vmatpush1.bf16.msra.mxu0 %v330
    %356 = vmatprep.subr.bf16.mxu0 0
    %357 = vmatpush1.bf16.msra.mxu0 %v329
    %358 = vmatprep.subr.bf16.mxu0 0
    %359 = vmatpush1.bf16.msra.mxu0 %v328
    %360 = vmatprep.subr.bf16.mxu0 0
    %361 = vmatpush2.bf16.msra.mxu0 0
    %362 = vmatprep.subr.bf16.mxu0 0
    %363 = vmatpush2.bf16.msra.mxu0 0
    %364 = vmatprep.subr.bf16.mxu0 0
    %365 = vmatpush2.bf16.msra.mxu0 0
    %366 = vmatprep.subr.bf16.mxu0 0
    %367 = vmatpush2.bf16.msra.mxu0 0
    %368 = vmatprep.subr.bf16.mxu0 0
    %369 = vmatpush2.bf16.msra.mxu0 0
    %370 = vmatprep.subr.bf16.mxu0 0
    %371 = vmatpush2.bf16.msra.mxu0 0
    %372 = vmatprep.subr.bf16.mxu0 0
    %373 = vmatpush2.bf16.msra.mxu0 0
    %374 = vmatprep.subr.bf16.mxu0 0
    %375 = vmatpush2.bf16.msra.mxu0 0
    %376 = vmatprep.mubr.bf16.mxu0 0
    %377 = vmatmul.mubr.bf16.gmra.mxu0 %v272
    %v378 = vpop.f32.mrf.mxu0
    %v379 = vadd.f32 %v294, %v378
    %v380 = vpop.f32.mrf.mxu0
    %v381 = vpop.f32.mrf.mxu0
    %v382 = vpop.f32.mrf.mxu0
    %383 = vdwg.mxu0
    %384 = vst [vmem:[#allocation10] sm:$0xff] %v379
    // Predicated region
    $region46: #{tpu_custom_call.1} parent=1 // pred_check
      _
    $region47: #{tpu_custom_call.1} parent=1 // pred_check_branch
      %386 = sbr.rel (0) target = $region49
    $region48: #{tpu_custom_call.1} parent=1 // pred_region
      %s388 = ssub.s32 128, 128
      %389 = vsyncadd [#allocation4], %s388
      %s391 = sshll.u32 [#allocation10], 4
      %s392 = int_to_ptr.vmem [resolvable:$true] %s391
      %394 = dma.vmem_to_hbm [thread:$0]  %s392, 128, %s7, [#allocation4]
    $region49: #{tpu_custom_call.1} parent=1 // pred_fallthru
      _
    // Predicated region
    $region50: #{tpu_custom_call.1} parent=1 // pred_check
      _
    $region51: #{tpu_custom_call.1} parent=1 // pred_check_branch
      %396 = sbr.rel (0) target = $region53
    $region52: #{tpu_custom_call.1} parent=1 // pred_region
      %397 = dma.done [#allocation4], 128
    $region53: #{tpu_custom_call.1} parent=1 // pred_fallthru
      _
    %398 = vsyncpa [#allocation3], 1
    %399 = vsyncpa [#allocation6], 1
    %400 = vsyncpa [#allocation9], 1
    %401 = vsyncpa [#allocation4], 1

</llo_original>
